<compile_context>
chip_gen: v5e
topology: v5e:2x2
jax: 0.10.0
libtpu: 0.0.40
codegen_flags: <defaults>
</compile_context>

<pallas_src>
import jax
import jax.numpy as jnp
import numpy as np
from jax.experimental import pallas as pl
from jax.experimental.pallas import tpu as pltpu


def _gelu_exact(x):
    # erf-based GELU, identical to torch.nn.GELU(approximate='none')
    return 0.5 * x * (1.0 + jax.lax.erf(x * (1.0 / np.sqrt(2.0))))


def gafn_kernel(x_ref, c_ref,
                wq_ref, bq_ref,
                wv_ref, bv_ref,
                wca_ref, wcb_ref, bc_ref,
                wa_ref, ba_ref,
                out_ref):
    # x_ref / c_ref / out_ref blocks: (TB, C, D)
    # wq/wv/wca/wcb: (D, D) bf16; bq/bv/bc/wa: (1, D) f32; ba: (1, 1) f32 in SMEM
    tb, c, d = x_ref.shape

    x = x_ref[...]          # (TB, C, D) f32; dropout1(x) == x (eval mode)
    cen = c_ref[...]        # (TB, C, D) f32

    # Fold batch*seq into the matmul M dimension (free relayout when C % 8 == 0).
    x2 = x.reshape(tb * c, d).astype(jnp.bfloat16)
    cen2 = cen.reshape(tb * c, d)
    cen_bf = cen2.astype(jnp.bfloat16)

    # q_proj1(x), v_proj1(centroids) — bf16 operands, f32 MXU accumulation.
    q = jnp.dot(x2, wq_ref[...], preferred_element_type=jnp.float32) + bq_ref[...]
    v = jnp.dot(cen_bf, wv_ref[...], preferred_element_type=jnp.float32) + bv_ref[...]

    # cat1(concat(v, q*v)) == v @ Wc[:D] + (q*v) @ Wc[D:] + bc
    qv = q * v
    h = (jnp.dot(v.astype(jnp.bfloat16), wca_ref[...],
                 preferred_element_type=jnp.float32)
         + jnp.dot(qv.astype(jnp.bfloat16), wcb_ref[...],
                   preferred_element_type=jnp.float32)
         + bc_ref[...])
    h = _gelu_exact(h)                                   # f32 elementwise

    # attn1(h): (TB*C, D) -> (TB, C, 1) as a VPU multiply + lane reduction
    # (kept off the MXU on purpose — free slots when the kernel is MXU-bound).
    h3 = h.reshape(tb, c, d)
    logits = jnp.sum(h3 * wa_ref[...], axis=-1, keepdims=True) + ba_ref[0, 0]

    # softmax over the sequence axis (dim=1), strictly per-sample.
    m = jnp.max(logits, axis=1, keepdims=True)
    e = jnp.exp(logits - m)
    attn = e * pl.reciprocal(jnp.sum(e, axis=1, keepdims=True), approx=True)

    out_ref[...] = (attn * cen).astype(out_ref.dtype)


def _choose_tb(n, c, d, act_budget_bytes=8 << 20):
    """Pick samples-per-block: fill VMEM activation budget, keep >=2 grid steps."""
    per_sample = 3 * 2 * c * d * 4          # x + cluster + out, double-buffered f32
    tb = max(1, min(n, act_budget_bytes // per_sample))
    if n >= 2:                               # >=2 grid steps so both v7x TCs get work
        tb = min(tb, max(1, n // 2))
    while n % tb:                            # must divide the batch
        tb -= 1
    return tb


@jax.jit
def gafn_forward(x, cluster, wq, bq, wv, bv, wca, wcb, bc, wa, ba):
    N, C, D = x.shape
    tb = _choose_tb(N, C, D)

    # Resident weights in bf16 (MXU-native, half the VMEM / HBM traffic).
    wq_bf = wq.astype(jnp.bfloat16)
    wv_bf = wv.astype(jnp.bfloat16)
    wca_bf = wca.astype(jnp.bfloat16)
    wcb_bf = wcb.astype(jnp.bfloat16)

    seq_spec = pl.BlockSpec((tb, C, D), lambda n: (n, 0, 0))
    mat_spec = pl.BlockSpec((D, D), lambda n: (0, 0))
    row_spec = pl.BlockSpec((1, D), lambda n: (0, 0))
    smem_spec = pl.BlockSpec(memory_space=pltpu.MemorySpace.SMEM)  # scalar attn bias

    # Explicit VMEM budget (v7x has only 64 MiB physical; stay well under).
    act_bytes = 3 * 2 * tb * C * D * 4                 # double-buffered activations
    w_bytes = 4 * 2 * D * D * 2 + 4 * 2 * D * 4        # bf16 weights + f32 biases
    vmem_limit = max(32 << 20, min(48 << 20, int((act_bytes + w_bytes) * 1.25)))

    cost = pl.CostEstimate(
        flops=8 * N * C * D * D,                        # four (N*C, D) x (D, D) matmuls
        transcendentals=2 * N * C * D,                  # erf (GELU) + exp (softmax)
        bytes_accessed=3 * N * C * D * 4 + 4 * D * D * 2 + (3 * D + D + 1) * 4,
    )

    return pl.pallas_call(
        gafn_kernel,
        out_shape=jax.ShapeDtypeStruct((N, C, D), x.dtype),
        grid_spec=pltpu.PrefetchScalarGridSpec(
            num_scalar_prefetch=0,
            grid=(N // tb,),
            in_specs=[
                seq_spec,            # x
                seq_spec,            # cluster / centroids
                mat_spec, row_spec,  # q_proj1 weight (in,out) bf16, bias f32
                mat_spec, row_spec,  # v_proj1
                mat_spec, mat_spec,  # cat1 weight split into two DxD halves (bf16)
                row_spec,            # cat1 bias
                row_spec,            # attn1 weight (1, D) f32 (VPU path)
                smem_spec,           # attn1 bias (1, 1) f32 in SMEM
            ],
            out_specs=seq_spec,
        ),
        compiler_params=pltpu.CompilerParams(
            dimension_semantics=("parallel",),
            vmem_limit_bytes=vmem_limit),
        cost_estimate=cost,
    )(x, cluster, wq_bf, bq, wv_bf, bv, wca_bf, wcb_bf, bc, wa, ba)


# ---------------------------------------------------------------------------
# Pure-JAX reference (emulates the same bf16-matmul / f32-accumulate recipe).
# ---------------------------------------------------------------------------
def _bf16_matmul(a, w):
    return jnp.dot(a.astype(jnp.bfloat16), w.astype(jnp.bfloat16),
                   preferred_element_type=jnp.float32)


def ref_forward(x, cluster, wq, bq, wv, bv, wca, wcb, bc, wa, ba):
    q = _bf16_matmul(x, wq) + bq
    v = _bf16_matmul(cluster, wv) + bv
    h = _bf16_matmul(v, wca) + _bf16_matmul(q * v, wcb) + bc
    h = _gelu_exact(h)
    logits = jnp.sum(h * wa[0], axis=-1, keepdims=True) + ba[0, 0]
    attn = jax.nn.softmax(logits, axis=1)
    return attn * cluster


def _linear_params(key, fan_in, fan_out):
    # deterministic torch-style uniform init; weight stored as (in, out)
    kw, kb = jax.random.split(key)
    bound = 1.0 / np.sqrt(fan_in)
    w = jax.random.uniform(kw, (fan_in, fan_out), jnp.float32, -bound, bound)
    b = jax.random.uniform(kb, (1, fan_out), jnp.float32, -bound, bound)
    return w, b


if __name__ == "__main__":
    # batch, seq, module_dim (scaled down from 512); N=8 -> TB=4, grid=2 steps.
    N, C, D = 8, 8, 128

    key = jax.random.PRNGKey(0)
    keys = jax.random.split(key, 6)

    x = jax.random.normal(keys[0], (N, C, D), jnp.float32)
    cluster = jax.random.normal(keys[1], (N, C, D), jnp.float32)

    wq, bq = _linear_params(keys[2], D, D)
    wv, bv = _linear_params(keys[3], D, D)
    wc_full, bc = _linear_params(keys[4], 2 * D, D)
    wca, wcb = wc_full[:D], wc_full[D:]               # split of cat1 weight
    wa_full, ba_full = _linear_params(keys[5], D, 1)  # attn1
    wa = wa_full.T                                    # (1, D)
    ba = ba_full.reshape(1, 1)

    out = gafn_forward(x, cluster, wq, bq, wv, bv, wca, wcb, bc, wa, ba)
    out = jax.block_until_ready(out)

    ref = ref_forward(x, cluster, wq, bq, wv, bv, wca, wcb, bc, wa, ba)
    np.testing.assert_allclose(np.asarray(out), np.asarray(ref),
                               rtol=2e-3, atol=2e-3)
    print("KERNEL_OK")
</pallas_src>

<mosaic_0001>
module attributes {stable_mosaic.version = 11 : i64} {
  func.func @gafn_kernel(%arg0: i32, %arg1: memref<4x8x128xf32, #tpu.memory_space<vmem>>, %arg2: memref<4x8x128xf32, #tpu.memory_space<vmem>>, %arg3: memref<128x128xbf16, #tpu.memory_space<vmem>>, %arg4: memref<1x128xf32, #tpu.memory_space<vmem>>, %arg5: memref<128x128xbf16, #tpu.memory_space<vmem>>, %arg6: memref<1x128xf32, #tpu.memory_space<vmem>>, %arg7: memref<128x128xbf16, #tpu.memory_space<vmem>>, %arg8: memref<128x128xbf16, #tpu.memory_space<vmem>>, %arg9: memref<1x128xf32, #tpu.memory_space<vmem>>, %arg10: memref<1x128xf32, #tpu.memory_space<vmem>>, %arg11: memref<1x1xf32, #tpu.memory_space<smem>>, %arg12: memref<4x8x128xf32, #tpu.memory_space<vmem>>) attributes {dimension_semantics = [#tpu.dimension_semantics<parallel>], iteration_bounds = array<i64: 2>, scalar_prefetch = 0 : i64, scratch_operands = 0 : i64, tpu.core_type = #tpu.core_type<tc>, window_params = [{transform_indices = @transform_0, window_bounds = array<i64: 4, 8, 128>}, {transform_indices = @transform_1, window_bounds = array<i64: 4, 8, 128>}, {pipeline_mode = #tpu.pipeline_mode<synchronous>, transform_indices = @transform_2, window_bounds = array<i64: 128, 128>}, {pipeline_mode = #tpu.pipeline_mode<synchronous>, transform_indices = @transform_3, window_bounds = array<i64: 1, 128>}, {pipeline_mode = #tpu.pipeline_mode<synchronous>, transform_indices = @transform_4, window_bounds = array<i64: 128, 128>}, {pipeline_mode = #tpu.pipeline_mode<synchronous>, transform_indices = @transform_5, window_bounds = array<i64: 1, 128>}, {pipeline_mode = #tpu.pipeline_mode<synchronous>, transform_indices = @transform_6, window_bounds = array<i64: 128, 128>}, {pipeline_mode = #tpu.pipeline_mode<synchronous>, transform_indices = @transform_7, window_bounds = array<i64: 128, 128>}, {pipeline_mode = #tpu.pipeline_mode<synchronous>, transform_indices = @transform_8, window_bounds = array<i64: 1, 128>}, {pipeline_mode = #tpu.pipeline_mode<synchronous>, transform_indices = @transform_9, window_bounds = array<i64: 1, 128>}, {transform_indices = @transform_10, window_bounds = array<i64: 1, 1>}, {transform_indices = @transform_11, window_bounds = array<i64: 4, 8, 128>}]} {
    %c0 = arith.constant 0 : index
    %c0_0 = arith.constant 0 : index
    %c0_1 = arith.constant 0 : index
    %0 = vector.load %arg1[%c0, %c0_0, %c0_1] : memref<4x8x128xf32, #tpu.memory_space<vmem>>, vector<4x8x128xf32>
    %c0_2 = arith.constant 0 : index
    %c0_3 = arith.constant 0 : index
    %c0_4 = arith.constant 0 : index
    %1 = vector.load %arg2[%c0_2, %c0_3, %c0_4] : memref<4x8x128xf32, #tpu.memory_space<vmem>>, vector<4x8x128xf32>
    %2 = vector.shape_cast %0 : vector<4x8x128xf32> to vector<32x128xf32>
    %3 = arith.truncf %2 : vector<32x128xf32> to vector<32x128xbf16>
    %4 = vector.shape_cast %1 : vector<4x8x128xf32> to vector<32x128xf32>
    %5 = arith.truncf %4 : vector<32x128xf32> to vector<32x128xbf16>
    %c0_5 = arith.constant 0 : index
    %c0_6 = arith.constant 0 : index
    %6 = vector.load %arg3[%c0_5, %c0_6] : memref<128x128xbf16, #tpu.memory_space<vmem>>, vector<128x128xbf16>
    %cst = arith.constant dense<0.000000e+00> : vector<32x128xf32>
    %7 = tpu.matmul %3, %6, %cst {dimension_numbers = #tpu.dot_dimension_numbers<[1], [0], [0], [1], [0, 0, 1, 1], [], []>} : vector<32x128xbf16>, vector<128x128xbf16>, vector<32x128xf32> -> vector<32x128xf32>
    %c0_7 = arith.constant 0 : index
    %c0_8 = arith.constant 0 : index
    %8 = vector.load %arg4[%c0_7, %c0_8] : memref<1x128xf32, #tpu.memory_space<vmem>>, vector<1x128xf32>
    %9 = vector.broadcast %8 : vector<1x128xf32> to vector<32x128xf32>
    %10 = arith.addf %7, %9 : vector<32x128xf32>
    %c0_9 = arith.constant 0 : index
    %c0_10 = arith.constant 0 : index
    %11 = vector.load %arg5[%c0_9, %c0_10] : memref<128x128xbf16, #tpu.memory_space<vmem>>, vector<128x128xbf16>
    %cst_11 = arith.constant dense<0.000000e+00> : vector<32x128xf32>
    %12 = tpu.matmul %5, %11, %cst_11 {dimension_numbers = #tpu.dot_dimension_numbers<[1], [0], [0], [1], [0, 0, 1, 1], [], []>} : vector<32x128xbf16>, vector<128x128xbf16>, vector<32x128xf32> -> vector<32x128xf32>
    %c0_12 = arith.constant 0 : index
    %c0_13 = arith.constant 0 : index
    %13 = vector.load %arg6[%c0_12, %c0_13] : memref<1x128xf32, #tpu.memory_space<vmem>>, vector<1x128xf32>
    %14 = vector.broadcast %13 : vector<1x128xf32> to vector<32x128xf32>
    %15 = arith.addf %12, %14 : vector<32x128xf32>
    %16 = arith.mulf %10, %15 : vector<32x128xf32>
    %17 = arith.truncf %15 : vector<32x128xf32> to vector<32x128xbf16>
    %c0_14 = arith.constant 0 : index
    %c0_15 = arith.constant 0 : index
    %18 = vector.load %arg7[%c0_14, %c0_15] : memref<128x128xbf16, #tpu.memory_space<vmem>>, vector<128x128xbf16>
    %cst_16 = arith.constant dense<0.000000e+00> : vector<32x128xf32>
    %19 = tpu.matmul %17, %18, %cst_16 {dimension_numbers = #tpu.dot_dimension_numbers<[1], [0], [0], [1], [0, 0, 1, 1], [], []>} : vector<32x128xbf16>, vector<128x128xbf16>, vector<32x128xf32> -> vector<32x128xf32>
    %20 = arith.truncf %16 : vector<32x128xf32> to vector<32x128xbf16>
    %c0_17 = arith.constant 0 : index
    %c0_18 = arith.constant 0 : index
    %21 = vector.load %arg8[%c0_17, %c0_18] : memref<128x128xbf16, #tpu.memory_space<vmem>>, vector<128x128xbf16>
    %cst_19 = arith.constant dense<0.000000e+00> : vector<32x128xf32>
    %22 = tpu.matmul %20, %21, %cst_19 {dimension_numbers = #tpu.dot_dimension_numbers<[1], [0], [0], [1], [0, 0, 1, 1], [], []>} : vector<32x128xbf16>, vector<128x128xbf16>, vector<32x128xf32> -> vector<32x128xf32>
    %23 = arith.addf %19, %22 : vector<32x128xf32>
    %c0_20 = arith.constant 0 : index
    %c0_21 = arith.constant 0 : index
    %24 = vector.load %arg9[%c0_20, %c0_21] : memref<1x128xf32, #tpu.memory_space<vmem>>, vector<1x128xf32>
    %25 = vector.broadcast %24 : vector<1x128xf32> to vector<32x128xf32>
    %26 = arith.addf %23, %25 : vector<32x128xf32>
    %cst_22 = arith.constant 5.000000e-01 : f32
    %27 = vector.broadcast %cst_22 : f32 to vector<32x128xf32>
    %28 = arith.mulf %27, %26 : vector<32x128xf32>
    %cst_23 = arith.constant 0.707106769 : f32
    %29 = vector.broadcast %cst_23 : f32 to vector<32x128xf32>
    %30 = arith.mulf %26, %29 : vector<32x128xf32>
    %31 = math.erf %30 : vector<32x128xf32>
    %cst_24 = arith.constant 1.000000e+00 : f32
    %32 = vector.broadcast %cst_24 : f32 to vector<32x128xf32>
    %33 = arith.addf %32, %31 : vector<32x128xf32>
    %34 = arith.mulf %28, %33 : vector<32x128xf32>
    %35 = vector.shape_cast %34 : vector<32x128xf32> to vector<4x8x128xf32>
    %c0_25 = arith.constant 0 : index
    %c0_26 = arith.constant 0 : index
    %36 = vector.load %arg10[%c0_25, %c0_26] : memref<1x128xf32, #tpu.memory_space<vmem>>, vector<1x128xf32>
    %37 = vector.shape_cast %36 : vector<1x128xf32> to vector<1x1x128xf32>
    %38 = vector.broadcast %37 : vector<1x1x128xf32> to vector<4x8x128xf32>
    %39 = arith.mulf %35, %38 : vector<4x8x128xf32>
    %cst_27 = arith.constant dense<0.000000e+00> : vector<4x8xf32>
    %40 = vector.multi_reduction <add>, %39, %cst_27 [2] : vector<4x8x128xf32> to vector<4x8xf32>
    %41 = vector.shape_cast %40 : vector<4x8xf32> to vector<4x8x1xf32>
    %c0_28 = arith.constant 0 : index
    %c0_29 = arith.constant 0 : index
    %42 = memref.load %arg11[%c0_28, %c0_29] : memref<1x1xf32, #tpu.memory_space<smem>>
    %43 = vector.broadcast %42 : f32 to vector<4x8x1xf32>
    %44 = arith.addf %41, %43 : vector<4x8x1xf32>
    %cst_30 = arith.constant dense<0xFF800000> : vector<4x1xf32>
    %45 = vector.multi_reduction <maximumf>, %44, %cst_30 [1] : vector<4x8x1xf32> to vector<4x1xf32>
    %46 = vector.shape_cast %45 : vector<4x1xf32> to vector<4x1x1xf32>
    %47 = vector.broadcast %46 : vector<4x1x1xf32> to vector<4x8x1xf32>
    %48 = arith.subf %44, %47 : vector<4x8x1xf32>
    %49 = math.exp %48 : vector<4x8x1xf32>
    %cst_31 = arith.constant dense<0.000000e+00> : vector<4x1xf32>
    %50 = vector.multi_reduction <add>, %49, %cst_31 [1] : vector<4x8x1xf32> to vector<4x1xf32>
    %51 = vector.shape_cast %50 : vector<4x1xf32> to vector<4x1x1xf32>
    %52 = tpu.reciprocal %51 {approx = true} : vector<4x1x1xf32> -> vector<4x1x1xf32>
    %53 = vector.broadcast %52 : vector<4x1x1xf32> to vector<4x8x1xf32>
    %54 = arith.mulf %49, %53 : vector<4x8x1xf32>
    %55 = vector.broadcast %54 : vector<4x8x1xf32> to vector<4x8x128xf32>
    %56 = arith.mulf %55, %1 : vector<4x8x128xf32>
    %c0_32 = arith.constant 0 : index
    %c0_33 = arith.constant 0 : index
    %c0_34 = arith.constant 0 : index
    %57 = vector.load %arg12[%c0_32, %c0_33, %c0_34] : memref<4x8x128xf32, #tpu.memory_space<vmem>>, vector<4x8x128xf32>
    tpu.vector_store %arg12[%c0_32, %c0_33, %c0_34], %56 {strides = array<i32>} : memref<4x8x128xf32, #tpu.memory_space<vmem>>, vector<4x8x128xf32>,
    return
  }
  func.func @transform_0(%arg0: i32) -> (i32, i32, i32) {
    %c0_i32 = arith.constant 0 : i32
    %c0_i32_0 = arith.constant 0 : i32
    %c0_i32_1 = arith.constant 0 : i32
    return %arg0, %c0_i32, %c0_i32_0 : i32, i32, i32
  }
  func.func @transform_1(%arg0: i32) -> (i32, i32, i32) {
    %c0_i32 = arith.constant 0 : i32
    %c0_i32_0 = arith.constant 0 : i32
    %c0_i32_1 = arith.constant 0 : i32
    return %arg0, %c0_i32, %c0_i32_0 : i32, i32, i32
  }
  func.func @transform_2(%arg0: i32) -> (i32, i32) {
    %c0_i32 = arith.constant 0 : i32
    %c0_i32_0 = arith.constant 0 : i32
    %c0_i32_1 = arith.constant 0 : i32
    return %c0_i32, %c0_i32_0 : i32, i32
  }
  func.func @transform_3(%arg0: i32) -> (i32, i32) {
    %c0_i32 = arith.constant 0 : i32
    %c0_i32_0 = arith.constant 0 : i32
    %c0_i32_1 = arith.constant 0 : i32
    return %c0_i32, %c0_i32_0 : i32, i32
  }
  func.func @transform_4(%arg0: i32) -> (i32, i32) {
    %c0_i32 = arith.constant 0 : i32
    %c0_i32_0 = arith.constant 0 : i32
    %c0_i32_1 = arith.constant 0 : i32
    return %c0_i32, %c0_i32_0 : i32, i32
  }
  func.func @transform_5(%arg0: i32) -> (i32, i32) {
    %c0_i32 = arith.constant 0 : i32
    %c0_i32_0 = arith.constant 0 : i32
    %c0_i32_1 = arith.constant 0 : i32
    return %c0_i32, %c0_i32_0 : i32, i32
  }
  func.func @transform_6(%arg0: i32) -> (i32, i32) {
    %c0_i32 = arith.constant 0 : i32
    %c0_i32_0 = arith.constant 0 : i32
    %c0_i32_1 = arith.constant 0 : i32
    return %c0_i32, %c0_i32_0 : i32, i32
  }
  func.func @transform_7(%arg0: i32) -> (i32, i32) {
    %c0_i32 = arith.constant 0 : i32
    %c0_i32_0 = arith.constant 0 : i32
    %c0_i32_1 = arith.constant 0 : i32
    return %c0_i32, %c0_i32_0 : i32, i32
  }
  func.func @transform_8(%arg0: i32) -> (i32, i32) {
    %c0_i32 = arith.constant 0 : i32
    %c0_i32_0 = arith.constant 0 : i32
    %c0_i32_1 = arith.constant 0 : i32
    return %c0_i32, %c0_i32_0 : i32, i32
  }
  func.func @transform_9(%arg0: i32) -> (i32, i32) {
    %c0_i32 = arith.constant 0 : i32
    %c0_i32_0 = arith.constant 0 : i32
    %c0_i32_1 = arith.constant 0 : i32
    return %c0_i32, %c0_i32_0 : i32, i32
  }
  func.func @transform_10(%arg0: i32) -> (i32, i32) {
    %c0_i32 = arith.constant 0 : i32
    %c0_i32_0 = arith.constant 0 : i32
    %c0_i32_1 = arith.constant 0 : i32
    return %c0_i32, %c0_i32_0 : i32, i32
  }
  func.func @transform_11(%arg0: i32) -> (i32, i32, i32) {
    %c0_i32 = arith.constant 0 : i32
    %c0_i32_0 = arith.constant 0 : i32
    %c0_i32_1 = arith.constant 0 : i32
    return %arg0, %c0_i32, %c0_i32_0 : i32, i32, i32
  }
}

</mosaic_0001>

<llo_original>
// kernel: gafn_forward.1
$region0: #{gafn_forward.1}
  #allocation0 [shape = 'u32[]', space=smem, size = 0x4, offset = 0x4, fixed_abs, tag = 'smem constant byte address 0x4 - core index']
  #allocation1 [shape = 'u32[72,128]{1,0:T(1,128)}', space=vmem, size = 0x9000, scoped, tag = 'internal scratch']
  #allocation2 [shape = 'f32[1,1]{1,0:T(1,128)S(6)}', space=smem, size = 0x200, scoped, tag = 'scoped memory for gafn_forward.1']
  %s0 = inlined_call_operand.vmem [shape: f32[8,8,128], index: 0, kind: input, shape index: {}]
  %s1 = inlined_call_operand.vmem [shape: f32[8,8,128], index: 1, kind: input, shape index: {}]
  %s2 = inlined_call_operand.vmem [shape: bf16[128,128], index: 2, kind: input, shape index: {}]
  %s3 = inlined_call_operand.vmem [shape: f32[1,128], index: 3, kind: input, shape index: {}]
  %s4 = inlined_call_operand.vmem [shape: bf16[128,128], index: 4, kind: input, shape index: {}]
  %s5 = inlined_call_operand.vmem [shape: f32[1,128], index: 5, kind: input, shape index: {}]
  %s6 = inlined_call_operand.vmem [shape: bf16[128,128], index: 6, kind: input, shape index: {}]
  %s7 = inlined_call_operand.vmem [shape: bf16[128,128], index: 7, kind: input, shape index: {}]
  %s8 = inlined_call_operand.vmem [shape: f32[1,128], index: 8, kind: input, shape index: {}]
  %s9 = inlined_call_operand.vmem [shape: f32[1,128], index: 9, kind: input, shape index: {}]
  %s10 = inlined_call_operand.<no memory space> [shape: f32[1,1], index: 10, kind: input, shape index: {}]
  %s11 = inlined_call_operand.hbm [shape: f32[8,8,128], index: 11, kind: output, shape index: {}]
  %s12 = sld [smem:[#allocation0]]
  $region77: #{gafn_forward.1} parent=0
    _
  %s14 = ssub.s32 1, %s12
  %s15 = scalar_select 0, %s14, %s12
  %16 = sst [smem:[#allocation2]] %s10
  $region1: #{gafn_forward.1} parent=0
    #allocation3 [shape = 'u8[32768]{0}', space=vmem, size = 0x8000, scoped, tag = 'output window, operand 0']
    #allocation4 [shape = 's32[2]{0}', space=sflag, size = 0x8, scoped, tag = 'scoped memory for gafn_forward.1']
    %17 = vsyncpa [#allocation4], 0
    %s18 = scalar_lea.sflag [#allocation4], 1
    %19 = vsyncpa %s18, 0
    loop: start=0, step=1, limit=4
    $region2: #{gafn_forward.1} parent=1 // loop_pre_header
      _
    $region3: #{gafn_forward.1} parent=1 // loop_header
      %s21 = sphi 0, %s25
      %p22 = scmp.ge.s32.totalorder %s21, 4
      %s31 = sphi 0, %s33
      %s34 = sphi 0, %s31
      %s35 = sphi 0, %s34
      %s51 = sphi 0, %s35
      %s57 = sphi 0, %s59
      %s60 = sphi 0, %s57
      %s61 = sphi 0, %s60
      %s77 = sphi 0, %s61
      %s81 = sphi 0, %s81
      %s83 = sphi 0, %s81
      %s84 = sphi 0, %s83
      %s98 = sphi 0, %s84
      %s102 = sphi 0, %s102
      %s104 = sphi 0, %s102
      %s105 = sphi 0, %s104
      %s119 = sphi 0, %s105
      %s123 = sphi 0, %s123
      %s125 = sphi 0, %s123
      %s126 = sphi 0, %s125
      %s140 = sphi 0, %s126
      %s144 = sphi 0, %s144
      %s146 = sphi 0, %s144
      %s147 = sphi 0, %s146
      %s161 = sphi 0, %s147
      %s165 = sphi 0, %s165
      %s167 = sphi 0, %s165
      %s168 = sphi 0, %s167
      %s182 = sphi 0, %s168
      %s186 = sphi 0, %s186
      %s188 = sphi 0, %s186
      %s189 = sphi 0, %s188
      %s203 = sphi 0, %s189
      %s207 = sphi 0, %s207
      %s209 = sphi 0, %s207
      %s210 = sphi 0, %s209
      %s224 = sphi 0, %s210
      %s228 = sphi 0, %s228
      %s230 = sphi 0, %s228
      %s231 = sphi 0, %s230
      %s245 = sphi 0, %s231
      %s249 = sphi 0, %s249
      %s251 = sphi 0, %s249
      %s252 = sphi 0, %s251
      %s266 = sphi 0, %s252
      %s272 = sphi 0, %s274
      %s275 = sphi 0, %s272
      %s276 = sphi 0, %s275
      %s292 = sphi 0, %s276
    $region4: #{gafn_forward.1} parent=1 // loop_header_branch
      %24 = sbr.rel (%p22) target = $region8
    $region5: #{gafn_forward.1} parent=1 // loop_body
      %s26 = ssub.s32 %s21, 1
      %s27 = ssub.s32 %s21, 2
      %s28 = sadd.s32 %s21, 1
      %s29 = ssub.s32 %s21, %s28
      %p30 = scmp.eq.s32.totalorder %s29, 0
      %s32 = sadd.s32 %s31, 1
      %s33 = scalar_select %p30, %s31, %s32
      %p36 = pneg %p30
      %p37 = scmp.eq.s32.totalorder %s21, 1
      %p38 = por %p36, %p37
      %p39 = scmp.ne.s32.totalorder %s31, %s34
      %p40 = scmp.eq.s32.totalorder %s21, 0
      %p41 = por %p39, %p40
      %p42 = scmp.ne.s32.totalorder %s31, %s34
      %p43 = scmp.eq.s32.totalorder %s26, 1
      %p44 = por %p42, %p43
      %p45 = scmp.ne.s32.totalorder %s34, %s35
      %p46 = scmp.eq.s32.totalorder %s26, 0
      %p47 = por %p45, %p46
      %p48 = scmp.ne.s32.totalorder %s34, %s35
      %p49 = scmp.eq.s32.totalorder %s27, 1
      %p50 = por %p48, %p49
      %p52 = scmp.ne.s32.totalorder %s35, %s51
      %p53 = scmp.eq.s32.totalorder %s27, 0
      %p54 = por %p52, %p53
      %s55 = ssub.s32 %s21, %s28
      %p56 = scmp.eq.s32.totalorder %s55, 0
      %s58 = sadd.s32 %s57, 1
      %s59 = scalar_select %p56, %s57, %s58
      %p62 = pneg %p56
      %p63 = scmp.eq.s32.totalorder %s21, 1
      %p64 = por %p62, %p63
      %p65 = scmp.ne.s32.totalorder %s57, %s60
      %p66 = scmp.eq.s32.totalorder %s21, 0
      %p67 = por %p65, %p66
      %p68 = scmp.ne.s32.totalorder %s57, %s60
      %p69 = scmp.eq.s32.totalorder %s26, 1
      %p70 = por %p68, %p69
      %p71 = scmp.ne.s32.totalorder %s60, %s61
      %p72 = scmp.eq.s32.totalorder %s26, 0
      %p73 = por %p71, %p72
      %p74 = scmp.ne.s32.totalorder %s60, %s61
      %p75 = scmp.eq.s32.totalorder %s27, 1
      %p76 = por %p74, %p75
      %p78 = scmp.ne.s32.totalorder %s61, %s77
      %p79 = scmp.eq.s32.totalorder %s27, 0
      %p80 = por %p78, %p79
      %s82 = sadd.s32 %s81, 1
      %p85 = scmp.eq.s32.totalorder %s21, 1
      %p86 = scmp.ne.s32.totalorder %s81, %s83
      %p87 = scmp.eq.s32.totalorder %s21, 0
      %p88 = por %p86, %p87
      %p89 = scmp.ne.s32.totalorder %s81, %s83
      %p90 = scmp.eq.s32.totalorder %s26, 1
      %p91 = por %p89, %p90
      %p92 = scmp.ne.s32.totalorder %s83, %s84
      %p93 = scmp.eq.s32.totalorder %s26, 0
      %p94 = por %p92, %p93
      %p95 = scmp.ne.s32.totalorder %s83, %s84
      %p96 = scmp.eq.s32.totalorder %s27, 1
      %p97 = por %p95, %p96
      %p99 = scmp.ne.s32.totalorder %s84, %s98
      %p100 = scmp.eq.s32.totalorder %s27, 0
      %p101 = por %p99, %p100
      %s103 = sadd.s32 %s102, 1
      %p106 = scmp.eq.s32.totalorder %s21, 1
      %p107 = scmp.ne.s32.totalorder %s102, %s104
      %p108 = scmp.eq.s32.totalorder %s21, 0
      %p109 = por %p107, %p108
      %p110 = scmp.ne.s32.totalorder %s102, %s104
      %p111 = scmp.eq.s32.totalorder %s26, 1
      %p112 = por %p110, %p111
      %p113 = scmp.ne.s32.totalorder %s104, %s105
      %p114 = scmp.eq.s32.totalorder %s26, 0
      %p115 = por %p113, %p114
      %p116 = scmp.ne.s32.totalorder %s104, %s105
      %p117 = scmp.eq.s32.totalorder %s27, 1
      %p118 = por %p116, %p117
      %p120 = scmp.ne.s32.totalorder %s105, %s119
      %p121 = scmp.eq.s32.totalorder %s27, 0
      %p122 = por %p120, %p121
      %s124 = sadd.s32 %s123, 1
      %p127 = scmp.eq.s32.totalorder %s21, 1
      %p128 = scmp.ne.s32.totalorder %s123, %s125
      %p129 = scmp.eq.s32.totalorder %s21, 0
      %p130 = por %p128, %p129
      %p131 = scmp.ne.s32.totalorder %s123, %s125
      %p132 = scmp.eq.s32.totalorder %s26, 1
      %p133 = por %p131, %p132
      %p134 = scmp.ne.s32.totalorder %s125, %s126
      %p135 = scmp.eq.s32.totalorder %s26, 0
      %p136 = por %p134, %p135
      %p137 = scmp.ne.s32.totalorder %s125, %s126
      %p138 = scmp.eq.s32.totalorder %s27, 1
      %p139 = por %p137, %p138
      %p141 = scmp.ne.s32.totalorder %s126, %s140
      %p142 = scmp.eq.s32.totalorder %s27, 0
      %p143 = por %p141, %p142
      %s145 = sadd.s32 %s144, 1
      %p148 = scmp.eq.s32.totalorder %s21, 1
      %p149 = scmp.ne.s32.totalorder %s144, %s146
      %p150 = scmp.eq.s32.totalorder %s21, 0
      %p151 = por %p149, %p150
      %p152 = scmp.ne.s32.totalorder %s144, %s146
      %p153 = scmp.eq.s32.totalorder %s26, 1
      %p154 = por %p152, %p153
      %p155 = scmp.ne.s32.totalorder %s146, %s147
      %p156 = scmp.eq.s32.totalorder %s26, 0
      %p157 = por %p155, %p156
      %p158 = scmp.ne.s32.totalorder %s146, %s147
      %p159 = scmp.eq.s32.totalorder %s27, 1
      %p160 = por %p158, %p159
      %p162 = scmp.ne.s32.totalorder %s147, %s161
      %p163 = scmp.eq.s32.totalorder %s27, 0
      %p164 = por %p162, %p163
      %s166 = sadd.s32 %s165, 1
      %p169 = scmp.eq.s32.totalorder %s21, 1
      %p170 = scmp.ne.s32.totalorder %s165, %s167
      %p171 = scmp.eq.s32.totalorder %s21, 0
      %p172 = por %p170, %p171
      %p173 = scmp.ne.s32.totalorder %s165, %s167
      %p174 = scmp.eq.s32.totalorder %s26, 1
      %p175 = por %p173, %p174
      %p176 = scmp.ne.s32.totalorder %s167, %s168
      %p177 = scmp.eq.s32.totalorder %s26, 0
      %p178 = por %p176, %p177
      %p179 = scmp.ne.s32.totalorder %s167, %s168
      %p180 = scmp.eq.s32.totalorder %s27, 1
      %p181 = por %p179, %p180
      %p183 = scmp.ne.s32.totalorder %s168, %s182
      %p184 = scmp.eq.s32.totalorder %s27, 0
      %p185 = por %p183, %p184
      %s187 = sadd.s32 %s186, 1
      %p190 = scmp.eq.s32.totalorder %s21, 1
      %p191 = scmp.ne.s32.totalorder %s186, %s188
      %p192 = scmp.eq.s32.totalorder %s21, 0
      %p193 = por %p191, %p192
      %p194 = scmp.ne.s32.totalorder %s186, %s188
      %p195 = scmp.eq.s32.totalorder %s26, 1
      %p196 = por %p194, %p195
      %p197 = scmp.ne.s32.totalorder %s188, %s189
      %p198 = scmp.eq.s32.totalorder %s26, 0
      %p199 = por %p197, %p198
      %p200 = scmp.ne.s32.totalorder %s188, %s189
      %p201 = scmp.eq.s32.totalorder %s27, 1
      %p202 = por %p200, %p201
      %p204 = scmp.ne.s32.totalorder %s189, %s203
      %p205 = scmp.eq.s32.totalorder %s27, 0
      %p206 = por %p204, %p205
      %s208 = sadd.s32 %s207, 1
      %p211 = scmp.eq.s32.totalorder %s21, 1
      %p212 = scmp.ne.s32.totalorder %s207, %s209
      %p213 = scmp.eq.s32.totalorder %s21, 0
      %p214 = por %p212, %p213
      %p215 = scmp.ne.s32.totalorder %s207, %s209
      %p216 = scmp.eq.s32.totalorder %s26, 1
      %p217 = por %p215, %p216
      %p218 = scmp.ne.s32.totalorder %s209, %s210
      %p219 = scmp.eq.s32.totalorder %s26, 0
      %p220 = por %p218, %p219
      %p221 = scmp.ne.s32.totalorder %s209, %s210
      %p222 = scmp.eq.s32.totalorder %s27, 1
      %p223 = por %p221, %p222
      %p225 = scmp.ne.s32.totalorder %s210, %s224
      %p226 = scmp.eq.s32.totalorder %s27, 0
      %p227 = por %p225, %p226
      %s229 = sadd.s32 %s228, 1
      %p232 = scmp.eq.s32.totalorder %s21, 1
      %p233 = scmp.ne.s32.totalorder %s228, %s230
      %p234 = scmp.eq.s32.totalorder %s21, 0
      %p235 = por %p233, %p234
      %p236 = scmp.ne.s32.totalorder %s228, %s230
      %p237 = scmp.eq.s32.totalorder %s26, 1
      %p238 = por %p236, %p237
      %p239 = scmp.ne.s32.totalorder %s230, %s231
      %p240 = scmp.eq.s32.totalorder %s26, 0
      %p241 = por %p239, %p240
      %p242 = scmp.ne.s32.totalorder %s230, %s231
      %p243 = scmp.eq.s32.totalorder %s27, 1
      %p244 = por %p242, %p243
      %p246 = scmp.ne.s32.totalorder %s231, %s245
      %p247 = scmp.eq.s32.totalorder %s27, 0
      %p248 = por %p246, %p247
      %s250 = sadd.s32 %s249, 1
      %p253 = scmp.eq.s32.totalorder %s21, 1
      %p254 = scmp.ne.s32.totalorder %s249, %s251
      %p255 = scmp.eq.s32.totalorder %s21, 0
      %p256 = por %p254, %p255
      %p257 = scmp.ne.s32.totalorder %s249, %s251
      %p258 = scmp.eq.s32.totalorder %s26, 1
      %p259 = por %p257, %p258
      %p260 = scmp.ne.s32.totalorder %s251, %s252
      %p261 = scmp.eq.s32.totalorder %s26, 0
      %p262 = por %p260, %p261
      %p263 = scmp.ne.s32.totalorder %s251, %s252
      %p264 = scmp.eq.s32.totalorder %s27, 1
      %p265 = por %p263, %p264
      %p267 = scmp.ne.s32.totalorder %s252, %s266
      %p268 = scmp.eq.s32.totalorder %s27, 0
      %p269 = por %p267, %p268
      %s270 = ssub.s32 %s21, %s28
      %p271 = scmp.eq.s32.totalorder %s270, 0
      %s273 = sadd.s32 %s272, 1
      %s274 = scalar_select %p271, %s272, %s273
      %p277 = pneg %p271
      %p278 = scmp.eq.s32.totalorder %s21, 1
      %p279 = por %p277, %p278
      %p280 = scmp.ne.s32.totalorder %s272, %s275
      %p281 = scmp.eq.s32.totalorder %s21, 0
      %p282 = por %p280, %p281
      %p283 = scmp.ne.s32.totalorder %s272, %s275
      %p284 = scmp.eq.s32.totalorder %s26, 1
      %p285 = por %p283, %p284
      %p286 = scmp.ne.s32.totalorder %s275, %s276
      %p287 = scmp.eq.s32.totalorder %s26, 0
      %p288 = por %p286, %p287
      %p289 = scmp.ne.s32.totalorder %s275, %s276
      %p290 = scmp.eq.s32.totalorder %s27, 1
      %p291 = por %p289, %p290
      %p293 = scmp.ne.s32.totalorder %s276, %s292
      %p294 = scmp.eq.s32.totalorder %s27, 0
      %p295 = por %p293, %p294
      %p296 = scmp.le.s32.totalorder 1, %s21
      %p297 = scmp.lt.s32.totalorder %s21, 3
      %p298 = pnand %p296, %p297
      %p299 = pneg %p298
      // Predicated region
      $region9: #{gafn_forward.1} parent=5 // pred_check
        _
      $region10: #{gafn_forward.1} parent=5 // pred_check_branch
        %301 = sbr.rel (%p298) target = $region12
      $region11: #{gafn_forward.1} parent=5 // pred_region
        %s302 = ssub.s32 %s21, 1
        // Predicated region
        $region13: #{gafn_forward.1} parent=11 // pred_check
          %p303 = pneg %p94
        $region14: #{gafn_forward.1} parent=11 // pred_check_branch
          %305 = sbr.rel (%p303) target = $region16
        $region15: #{gafn_forward.1} parent=11 // pred_region
          _
        $region16: #{gafn_forward.1} parent=11 // pred_fallthru
          _
        // Predicated region
        $region17: #{gafn_forward.1} parent=11 // pred_check
          %p306 = pneg %p115
        $region18: #{gafn_forward.1} parent=11 // pred_check_branch
          %308 = sbr.rel (%p306) target = $region20
        $region19: #{gafn_forward.1} parent=11 // pred_region
          _
        $region20: #{gafn_forward.1} parent=11 // pred_fallthru
          _
        // Predicated region
        $region21: #{gafn_forward.1} parent=11 // pred_check
          %p309 = pneg %p136
        $region22: #{gafn_forward.1} parent=11 // pred_check_branch
          %311 = sbr.rel (%p309) target = $region24
        $region23: #{gafn_forward.1} parent=11 // pred_region
          _
        $region24: #{gafn_forward.1} parent=11 // pred_fallthru
          _
        // Predicated region
        $region25: #{gafn_forward.1} parent=11 // pred_check
          %p312 = pneg %p157
        $region26: #{gafn_forward.1} parent=11 // pred_check_branch
          %314 = sbr.rel (%p312) target = $region28
        $region27: #{gafn_forward.1} parent=11 // pred_region
          _
        $region28: #{gafn_forward.1} parent=11 // pred_fallthru
          _
        // Predicated region
        $region29: #{gafn_forward.1} parent=11 // pred_check
          %p315 = pneg %p178
        $region30: #{gafn_forward.1} parent=11 // pred_check_branch
          %317 = sbr.rel (%p315) target = $region32
        $region31: #{gafn_forward.1} parent=11 // pred_region
          _
        $region32: #{gafn_forward.1} parent=11 // pred_fallthru
          _
        // Predicated region
        $region33: #{gafn_forward.1} parent=11 // pred_check
          %p318 = pneg %p199
        $region34: #{gafn_forward.1} parent=11 // pred_check_branch
          %320 = sbr.rel (%p318) target = $region36
        $region35: #{gafn_forward.1} parent=11 // pred_region
          _
        $region36: #{gafn_forward.1} parent=11 // pred_fallthru
          _
        // Predicated region
        $region37: #{gafn_forward.1} parent=11 // pred_check
          %p321 = pneg %p220
        $region38: #{gafn_forward.1} parent=11 // pred_check_branch
          %323 = sbr.rel (%p321) target = $region40
        $region39: #{gafn_forward.1} parent=11 // pred_region
          _
        $region40: #{gafn_forward.1} parent=11 // pred_fallthru
          _
        // Predicated region
        $region41: #{gafn_forward.1} parent=11 // pred_check
          %p324 = pneg %p241
        $region42: #{gafn_forward.1} parent=11 // pred_check_branch
          %326 = sbr.rel (%p324) target = $region44
        $region43: #{gafn_forward.1} parent=11 // pred_region
          _
        $region44: #{gafn_forward.1} parent=11 // pred_fallthru
          _
        // Predicated region
        $region45: #{gafn_forward.1} parent=11 // pred_check
          %p327 = pneg %p262
        $region46: #{gafn_forward.1} parent=11 // pred_check_branch
          %329 = sbr.rel (%p327) target = $region48
        $region47: #{gafn_forward.1} parent=11 // pred_region
          _
        $region48: #{gafn_forward.1} parent=11 // pred_fallthru
          _
      $region12: #{gafn_forward.1} parent=5 // pred_fallthru
        _
      %p330 = scmp.lt.s32.totalorder %s21, 2
      // Predicated region
      $region49: #{gafn_forward.1} parent=5 // pred_check
        %p331 = pneg %p330
      $region50: #{gafn_forward.1} parent=5 // pred_check_branch
        %333 = sbr.rel (%p331) target = $region52
      $region51: #{gafn_forward.1} parent=5 // pred_region
        // Predicated region
        $region53: #{gafn_forward.1} parent=51 // pred_check
          %p334 = pneg %p41
        $region54: #{gafn_forward.1} parent=51 // pred_check_branch
          %336 = sbr.rel (%p334) target = $region56
        $region55: #{gafn_forward.1} parent=51 // pred_region
          %s337 = smul.u32 4, %s21
          %p338 = scmp.lt.s32.totalorder %s337, 7
          %s339 = scalar_select %p338, %s337, 7
          %s340 = smul.addr %s339, 8
          %s341 = scalar_lea.vmem %s0, %s340
          %s342 = smul.u32 4, %s21
        $region56: #{gafn_forward.1} parent=51 // pred_fallthru
          _
        // Predicated region
        $region57: #{gafn_forward.1} parent=51 // pred_check
          %p343 = pneg %p67
        $region58: #{gafn_forward.1} parent=51 // pred_check_branch
          %345 = sbr.rel (%p343) target = $region60
        $region59: #{gafn_forward.1} parent=51 // pred_region
          %s346 = smul.u32 4, %s21
          %p347 = scmp.lt.s32.totalorder %s346, 7
          %s348 = scalar_select %p347, %s346, 7
          %s349 = smul.addr %s348, 8
          %s350 = scalar_lea.vmem %s1, %s349
          %s351 = smul.u32 4, %s21
        $region60: #{gafn_forward.1} parent=51 // pred_fallthru
          _
      $region52: #{gafn_forward.1} parent=5 // pred_fallthru
        _
      %p352 = scmp.le.s32.totalorder 1, %s21
      %p353 = scmp.lt.s32.totalorder %s21, 3
      %p354 = pnand %p352, %p353
      %p355 = pneg %p354
      // Predicated region
      $region61: #{gafn_forward.1} parent=5 // pred_check
        _
      $region62: #{gafn_forward.1} parent=5 // pred_check_branch
        %357 = sbr.rel (%p354) target = $region64
      $region63: #{gafn_forward.1} parent=5 // pred_region
        %s358 = ssub.s32 %s21, 1
        %s359 = smul.u32 4, %s26
        %p360 = scmp.lt.s32.totalorder %s359, 7
        %s361 = scalar_select %p360, %s359, 7
        %s362 = smul.addr %s361, 8
        %s363 = scalar_lea.vmem %s0, %s362
        %p364 = pneg %p47
        %p365 = pneg %p44
        %s366 = smul.u32 4, %s26
        %p367 = scmp.lt.s32.totalorder %s366, 7
        %s368 = scalar_select %p367, %s366, 7
        %s369 = smul.addr %s368, 8
        %s370 = scalar_lea.vmem %s1, %s369
        %p371 = pneg %p73
        %p372 = pneg %p70
        %p373 = pneg %p94
        %p374 = pneg %p91
        %p375 = pneg %p115
        %p376 = pneg %p112
        %p377 = pneg %p136
        %p378 = pneg %p133
        %p379 = pneg %p157
        %p380 = pneg %p154
        %p381 = pneg %p178
        %p382 = pneg %p175
        %p383 = pneg %p199
        %p384 = pneg %p196
        %p385 = pneg %p220
        %p386 = pneg %p217
        %p387 = pneg %p241
        %p388 = pneg %p238
        %p389 = pneg %p262
        %p390 = pneg %p259
        %p391 = pneg %p288
        %p392 = pneg %p285
        %s393 = sand.u32 %s275, 1
        %s394 = scalar_lea.sflag [#allocation4], %s393
        %s395 = sand.u32 %s275, 1
        %s396 = smul.addr %s395, 32
        %s397 = scalar_lea.vmem [#allocation3], %s396
        %s398 = smul.u32 4, %s26
        %p399 = scmp.lt.s32.totalorder %s398, 7
        %s400 = scalar_select %p399, %s398, 7
        %s401 = smul.addr %s400, 8
        %s402 = scalar_lea.vmem %s0, %s401
        %s403 = smul.u32 4, %s26
        %s404 = smul.u32 4, %s26
        %p405 = scmp.lt.s32.totalorder %s404, 7
        %s406 = scalar_select %p405, %s404, 7
        %s407 = smul.addr %s406, 8
        %s408 = scalar_lea.vmem %s1, %s407
        %s409 = smul.u32 4, %s26
        %s410 = smul.u32 4, %s26
        %v411 = vld [vmem:[%s402] sm:$0xff]
        %v412 = vld [vmem:[%s402 + $0x8] sm:$0xff]
        %v413 = vld [vmem:[%s402 + $0x10] sm:$0xff]
        %v414 = vld [vmem:[%s402 + $0x18] sm:$0xff]
        %v415 = vld [vmem:[%s408] sm:$0xff]
        %v416 = vld [vmem:[%s408 + $0x8] sm:$0xff]
        %v417 = vld [vmem:[%s408 + $0x10] sm:$0xff]
        %v418 = vld [vmem:[%s408 + $0x18] sm:$0xff]
        %v419 = vpack.c.bf16 %v412, %v411
        %v420 = vpack.c.bf16 %v414, %v413
        %v421 = vpack.c.bf16 %v416, %v415
        %v422 = vpack.c.bf16 %v418, %v417
        %v423 = vld [vmem:[%s2] sm:$0xf]
        %v424 = vld [vmem:[%s2 + $0x4] sm:$0xf]
        %v425 = vld [vmem:[%s2 + $0x8] sm:$0xf]
        %v426 = vld [vmem:[%s2 + $0xc] sm:$0xf]
        %v427 = vld [vmem:[%s2 + $0x10] sm:$0xf]
        %v428 = vld [vmem:[%s2 + $0x14] sm:$0xf]
        %v429 = vld [vmem:[%s2 + $0x18] sm:$0xf]
        %v430 = vld [vmem:[%s2 + $0x1c] sm:$0xf]
        %v431 = vld [vmem:[%s2 + $0x20] sm:$0xf]
        %v432 = vld [vmem:[%s2 + $0x24] sm:$0xf]
        %v433 = vld [vmem:[%s2 + $0x28] sm:$0xf]
        %v434 = vld [vmem:[%s2 + $0x2c] sm:$0xf]
        %v435 = vld [vmem:[%s2 + $0x30] sm:$0xf]
        %v436 = vld [vmem:[%s2 + $0x34] sm:$0xf]
        %v437 = vld [vmem:[%s2 + $0x38] sm:$0xf]
        %v438 = vld [vmem:[%s2 + $0x3c] sm:$0xf]
        %v439 = vld [vmem:[%s3] sm:$0x1]
        %v441 = vperm.slane %v439, 0
        %v459 = vunpack.c.l.b16 %v423
        %v460 = vunpack.c.l.b16 %v424
        %v461 = vunpack.c.l.b16 %v425
        %v462 = vunpack.c.l.b16 %v426
        %v463 = vunpack.c.l.b16 %v427
        %v464 = vunpack.c.l.b16 %v428
        %v465 = vunpack.c.l.b16 %v429
        %v466 = vunpack.c.l.b16 %v430
        %v467 = vunpack.c.l.b16 %v431
        %v468 = vunpack.c.l.b16 %v432
        %v469 = vunpack.c.l.b16 %v433
        %v470 = vunpack.c.l.b16 %v434
        %v471 = vunpack.c.l.b16 %v435
        %v472 = vunpack.c.l.b16 %v436
        %v473 = vunpack.c.l.b16 %v437
        %v474 = vunpack.c.l.b16 %v438
        %v475 = vpack.c.b16 %v460, %v459
        %v476 = vpack.c.b16 %v462, %v461
        %v477 = vpack.c.b16 %v464, %v463
        %v478 = vpack.c.b16 %v466, %v465
        %v479 = vpack.c.b16 %v468, %v467
        %v480 = vpack.c.b16 %v470, %v469
        %v481 = vpack.c.b16 %v472, %v471
        %v482 = vpack.c.b16 %v474, %v473
        %491 = vmatpush.bf16.msra.mxu0 %v482
        %492 = vmatpush.bf16.msra.mxu0 %v481
        %493 = vmatpush.bf16.msra.mxu0 %v480
        %494 = vmatpush.bf16.msra.mxu0 %v479
        %495 = vmatpush.bf16.msra.mxu0 %v478
        %496 = vmatpush.bf16.msra.mxu0 %v477
        %497 = vmatpush.bf16.msra.mxu0 %v476
        %498 = vmatpush.bf16.msra.mxu0 %v475
        %499 = vmatmul.bf16.gmra.mxu0 %v419
        %v500 = vpop.f32.mrf.mxu0
        %v501 = vadd.f32 %v441, %v500
        %v502 = vpop.f32.mrf.mxu0
        %v503 = vadd.f32 %v441, %v502
        %504 = vmatmul.bf16.gmra.mxu0 %v420
        %v505 = vpop.f32.mrf.mxu0
        %v506 = vadd.f32 %v441, %v505
        %v507 = vpop.f32.mrf.mxu0
        %v508 = vadd.f32 %v441, %v507
        %509 = vdwg.mxu0
        %v510 = vld [vmem:[%s4] sm:$0xf]
        %v511 = vld [vmem:[%s4 + $0x4] sm:$0xf]
        %v512 = vld [vmem:[%s4 + $0x8] sm:$0xf]
        %v513 = vld [vmem:[%s4 + $0xc] sm:$0xf]
        %v514 = vld [vmem:[%s4 + $0x10] sm:$0xf]
        %v515 = vld [vmem:[%s4 + $0x14] sm:$0xf]
        %v516 = vld [vmem:[%s4 + $0x18] sm:$0xf]
        %v517 = vld [vmem:[%s4 + $0x1c] sm:$0xf]
        %v518 = vld [vmem:[%s4 + $0x20] sm:$0xf]
        %v519 = vld [vmem:[%s4 + $0x24] sm:$0xf]
        %v520 = vld [vmem:[%s4 + $0x28] sm:$0xf]
        %v521 = vld [vmem:[%s4 + $0x2c] sm:$0xf]
        %v522 = vld [vmem:[%s4 + $0x30] sm:$0xf]
        %v523 = vld [vmem:[%s4 + $0x34] sm:$0xf]
        %v524 = vld [vmem:[%s4 + $0x38] sm:$0xf]
        %v525 = vld [vmem:[%s4 + $0x3c] sm:$0xf]
        %v526 = vld [vmem:[%s5] sm:$0x1]
        %v528 = vperm.slane %v526, 0
        %v546 = vunpack.c.l.b16 %v510
        %v547 = vunpack.c.l.b16 %v511
        %v548 = vunpack.c.l.b16 %v512
        %v549 = vunpack.c.l.b16 %v513
        %v550 = vunpack.c.l.b16 %v514
        %v551 = vunpack.c.l.b16 %v515
        %v552 = vunpack.c.l.b16 %v516
        %v553 = vunpack.c.l.b16 %v517
        %v554 = vunpack.c.l.b16 %v518
        %v555 = vunpack.c.l.b16 %v519
        %v556 = vunpack.c.l.b16 %v520
        %v557 = vunpack.c.l.b16 %v521
        %v558 = vunpack.c.l.b16 %v522
        %v559 = vunpack.c.l.b16 %v523
        %v560 = vunpack.c.l.b16 %v524
        %v561 = vunpack.c.l.b16 %v525
        %v562 = vpack.c.b16 %v547, %v546
        %v563 = vpack.c.b16 %v549, %v548
        %v564 = vpack.c.b16 %v551, %v550
        %v565 = vpack.c.b16 %v553, %v552
        %v566 = vpack.c.b16 %v555, %v554
        %v567 = vpack.c.b16 %v557, %v556
        %v568 = vpack.c.b16 %v559, %v558
        %v569 = vpack.c.b16 %v561, %v560
        %578 = vmatpush.bf16.msra.mxu0 %v569
        %579 = vmatpush.bf16.msra.mxu0 %v568
        %580 = vmatpush.bf16.msra.mxu0 %v567
        %581 = vmatpush.bf16.msra.mxu0 %v566
        %582 = vmatpush.bf16.msra.mxu0 %v565
        %583 = vmatpush.bf16.msra.mxu0 %v564
        %584 = vmatpush.bf16.msra.mxu0 %v563
        %585 = vmatpush.bf16.msra.mxu0 %v562
        %586 = vmatmul.bf16.gmra.mxu0 %v421
        %v587 = vpop.f32.mrf.mxu0
        %v588 = vadd.f32 %v528, %v587
        %v589 = vpop.f32.mrf.mxu0
        %v590 = vadd.f32 %v528, %v589
        %591 = vmatmul.bf16.gmra.mxu0 %v422
        %v592 = vpop.f32.mrf.mxu0
        %v593 = vadd.f32 %v528, %v592
        %v594 = vpop.f32.mrf.mxu0
        %v595 = vadd.f32 %v528, %v594
        %596 = vdwg.mxu0
        %v597 = vmul.f32 %v501, %v588
        %v598 = vmul.f32 %v503, %v590
        %v599 = vmul.f32 %v506, %v593
        %v600 = vmul.f32 %v508, %v595
        %v601 = vpack.c.bf16 %v590, %v588
        %v602 = vpack.c.bf16 %v595, %v593
        %v603 = vld [vmem:[%s6] sm:$0xf]
        %v604 = vld [vmem:[%s6 + $0x4] sm:$0xf]
        %v605 = vld [vmem:[%s6 + $0x8] sm:$0xf]
        %v606 = vld [vmem:[%s6 + $0xc] sm:$0xf]
        %v607 = vld [vmem:[%s6 + $0x10] sm:$0xf]
        %v608 = vld [vmem:[%s6 + $0x14] sm:$0xf]
        %v609 = vld [vmem:[%s6 + $0x18] sm:$0xf]
        %v610 = vld [vmem:[%s6 + $0x1c] sm:$0xf]
        %v611 = vld [vmem:[%s6 + $0x20] sm:$0xf]
        %v612 = vld [vmem:[%s6 + $0x24] sm:$0xf]
        %v613 = vld [vmem:[%s6 + $0x28] sm:$0xf]
        %v614 = vld [vmem:[%s6 + $0x2c] sm:$0xf]
        %v615 = vld [vmem:[%s6 + $0x30] sm:$0xf]
        %v616 = vld [vmem:[%s6 + $0x34] sm:$0xf]
        %v617 = vld [vmem:[%s6 + $0x38] sm:$0xf]
        %v618 = vld [vmem:[%s6 + $0x3c] sm:$0xf]
        %v619 = vpack.c.bf16 %v598, %v597
        %v620 = vpack.c.bf16 %v600, %v599
        %v621 = vld [vmem:[%s7] sm:$0xf]
        %v622 = vld [vmem:[%s7 + $0x4] sm:$0xf]
        %v623 = vld [vmem:[%s7 + $0x8] sm:$0xf]
        %v624 = vld [vmem:[%s7 + $0xc] sm:$0xf]
        %v625 = vld [vmem:[%s7 + $0x10] sm:$0xf]
        %v626 = vld [vmem:[%s7 + $0x14] sm:$0xf]
        %v627 = vld [vmem:[%s7 + $0x18] sm:$0xf]
        %v628 = vld [vmem:[%s7 + $0x1c] sm:$0xf]
        %v629 = vld [vmem:[%s7 + $0x20] sm:$0xf]
        %v630 = vld [vmem:[%s7 + $0x24] sm:$0xf]
        %v631 = vld [vmem:[%s7 + $0x28] sm:$0xf]
        %v632 = vld [vmem:[%s7 + $0x2c] sm:$0xf]
        %v633 = vld [vmem:[%s7 + $0x30] sm:$0xf]
        %v634 = vld [vmem:[%s7 + $0x34] sm:$0xf]
        %v635 = vld [vmem:[%s7 + $0x38] sm:$0xf]
        %v636 = vld [vmem:[%s7 + $0x3c] sm:$0xf]
        %v653 = vunpack.c.l.b16 %v621
        %v654 = vunpack.c.l.b16 %v622
        %v655 = vunpack.c.l.b16 %v623
        %v656 = vunpack.c.l.b16 %v624
        %v657 = vunpack.c.l.b16 %v625
        %v658 = vunpack.c.l.b16 %v626
        %v659 = vunpack.c.l.b16 %v627
        %v660 = vunpack.c.l.b16 %v628
        %v661 = vunpack.c.l.b16 %v629
        %v662 = vunpack.c.l.b16 %v630
        %v663 = vunpack.c.l.b16 %v631
        %v664 = vunpack.c.l.b16 %v632
        %v665 = vunpack.c.l.b16 %v633
        %v666 = vunpack.c.l.b16 %v634
        %v667 = vunpack.c.l.b16 %v635
        %v668 = vunpack.c.l.b16 %v636
        %v669 = vpack.c.b16 %v654, %v653
        %v670 = vpack.c.b16 %v656, %v655
        %v671 = vpack.c.b16 %v658, %v657
        %v672 = vpack.c.b16 %v660, %v659
        %v673 = vpack.c.b16 %v662, %v661
        %v674 = vpack.c.b16 %v664, %v663
        %v675 = vpack.c.b16 %v666, %v665
        %v676 = vpack.c.b16 %v668, %v667
        %685 = vmatpush.bf16.msra.mxu0 %v676
        %686 = vmatpush.bf16.msra.mxu0 %v675
        %687 = vmatpush.bf16.msra.mxu0 %v674
        %688 = vmatpush.bf16.msra.mxu0 %v673
        %689 = vmatpush.bf16.msra.mxu0 %v672
        %690 = vmatpush.bf16.msra.mxu0 %v671
        %691 = vmatpush.bf16.msra.mxu0 %v670
        %692 = vmatpush.bf16.msra.mxu0 %v669
        %693 = vmatmul.bf16.gmra.mxu0 %v619
        %v694 = vpop.f32.mrf.mxu0
        %v695 = vadd.f32 0.0, %v694
        %v696 = vpop.f32.mrf.mxu0
        %v697 = vadd.f32 0.0, %v696
        %698 = vmatmul.bf16.gmra.mxu0 %v620
        %v699 = vpop.f32.mrf.mxu0
        %v700 = vadd.f32 0.0, %v699
        %v701 = vpop.f32.mrf.mxu0
        %v702 = vadd.f32 0.0, %v701
        %703 = vdwg.mxu0
        %v720 = vunpack.c.l.b16 %v603
        %v721 = vunpack.c.l.b16 %v604
        %v722 = vunpack.c.l.b16 %v605
        %v723 = vunpack.c.l.b16 %v606
        %v724 = vunpack.c.l.b16 %v607
        %v725 = vunpack.c.l.b16 %v608
        %v726 = vunpack.c.l.b16 %v609
        %v727 = vunpack.c.l.b16 %v610
        %v728 = vunpack.c.l.b16 %v611
        %v729 = vunpack.c.l.b16 %v612
        %v730 = vunpack.c.l.b16 %v613
        %v731 = vunpack.c.l.b16 %v614
        %v732 = vunpack.c.l.b16 %v615
        %v733 = vunpack.c.l.b16 %v616
        %v734 = vunpack.c.l.b16 %v617
        %v735 = vunpack.c.l.b16 %v618
        %v736 = vpack.c.b16 %v721, %v720
        %v737 = vpack.c.b16 %v723, %v722
        %v738 = vpack.c.b16 %v725, %v724
        %v739 = vpack.c.b16 %v727, %v726
        %v740 = vpack.c.b16 %v729, %v728
        %v741 = vpack.c.b16 %v731, %v730
        %v742 = vpack.c.b16 %v733, %v732
        %v743 = vpack.c.b16 %v735, %v734
        %752 = vmatpush.bf16.msra.mxu0 %v743
        %753 = vmatpush.bf16.msra.mxu0 %v742
        %754 = vmatpush.bf16.msra.mxu0 %v741
        %755 = vmatpush.bf16.msra.mxu0 %v740
        %756 = vmatpush.bf16.msra.mxu0 %v739
        %757 = vmatpush.bf16.msra.mxu0 %v738
        %758 = vmatpush.bf16.msra.mxu0 %v737
        %759 = vmatpush.bf16.msra.mxu0 %v736
        %760 = vmatmul.bf16.gmra.mxu0 %v601
        %v761 = vpop.f32.mrf.mxu0
        %v762 = vadd.f32 %v695, %v761
        %v763 = vpop.f32.mrf.mxu0
        %v764 = vadd.f32 %v697, %v763
        %765 = vmatmul.bf16.gmra.mxu0 %v602
        %v766 = vpop.f32.mrf.mxu0
        %v767 = vadd.f32 %v700, %v766
        %v768 = vpop.f32.mrf.mxu0
        %v769 = vadd.f32 %v702, %v768
        %770 = vdwg.mxu0
        %v771 = vld [vmem:[%s8] sm:$0x1]
        %v773 = vperm.slane %v771, 0
        %v775 = vadd.f32 %v762, %v773
        %v776 = vadd.f32 %v764, %v773
        %v777 = vadd.f32 %v767, %v773
        %v778 = vadd.f32 %v769, %v773
        %v779 = vmul.f32 %v775, 0.5
        %v780 = vmul.f32 %v776, 0.5
        %v781 = vmul.f32 %v777, 0.5
        %v782 = vmul.f32 %v778, 0.5
        %v783 = vmul.f32 %v775, 0.70710677
        %v784 = vmul.f32 %v776, 0.70710677
        %v785 = vmul.f32 %v777, 0.70710677
        %v786 = vmul.f32 %v778, 0.70710677
        %v787 = vmul.f32 %v783, %v783
        %v788 = vmin.f32 16.0, %v787
        %v789 = vmul.f32 %v788, 2.1237322e-06
        %v790 = vadd.f32 %v789, 0.00028619796
        %v791 = vmul.f32 %v788, %v790
        %v792 = vadd.f32 %v791, 0.0036580483
        %v793 = vmul.f32 %v788, %v792
        %v794 = vadd.f32 %v793, 0.05243302
        %v795 = vmul.f32 %v788, %v794
        %v796 = vadd.f32 %v795, 0.18741608
        %v797 = vmul.f32 %v788, %v796
        %v798 = vadd.f32 %v797, 1.1283791
        %v799 = vmul.f32 %v783, %v798
        %v800 = vmul.f32 %v788, 3.8918573e-05
        %v801 = vadd.f32 %v800, 0.001143296
        %v802 = vmul.f32 %v788, %v801
        %v803 = vadd.f32 %v802, 0.014752088
        %v804 = vmul.f32 %v788, %v803
        %v805 = vadd.f32 %v804, 0.112945676
        %v806 = vmul.f32 %v788, %v805
        %v807 = vadd.f32 %v806, 0.4994258
        %v808 = vmul.f32 %v788, %v807
        %v809 = vadd.f32 %v808, 1.0
        %v810 = vrcp.pop %v809
        %v811 = vmul.f32 %v809, %v810
        %v812 = vsub.f32 1.0, %v811
        %v813 = vmul.f32 %v810, %v812
        %v814 = vadd.f32 %v810, %v813
        %vm815 = vweird.f32 %v809
        %vm816 = vweird.f32 %v810
        %vm817 = vmor %vm815, %vm816
        %v818 = vsel %vm817, %v810, %v814
        %v819 = vand.u32 2147483647, %v809
        %vm820 = vcmp.eq.f32.partialorder %v819, 8.507059e+37
        %v821 = vand.u32 %v809, 2147483648
        %v822 = vor.u32 1.1754944e-38, %v821
        %v823 = vsel %vm820, %v822, %v818
        %v824 = vmul.f32 %v799, %v823
        %v825 = vmin.f32 %v824, 1.0
        %v826 = vmax.f32 %v825, -1.0
        %v827 = vmul.f32 %v784, %v784
        %v828 = vmin.f32 16.0, %v827
        %v829 = vmul.f32 %v828, 2.1237322e-06
        %v830 = vadd.f32 %v829, 0.00028619796
        %v831 = vmul.f32 %v828, %v830
        %v832 = vadd.f32 %v831, 0.0036580483
        %v833 = vmul.f32 %v828, %v832
        %v834 = vadd.f32 %v833, 0.05243302
        %v835 = vmul.f32 %v828, %v834
        %v836 = vadd.f32 %v835, 0.18741608
        %v837 = vmul.f32 %v828, %v836
        %v838 = vadd.f32 %v837, 1.1283791
        %v839 = vmul.f32 %v784, %v838
        %v840 = vmul.f32 %v828, 3.8918573e-05
        %v841 = vadd.f32 %v840, 0.001143296
        %v842 = vmul.f32 %v828, %v841
        %v843 = vadd.f32 %v842, 0.014752088
        %v844 = vmul.f32 %v828, %v843
        %v845 = vadd.f32 %v844, 0.112945676
        %v846 = vmul.f32 %v828, %v845
        %v847 = vadd.f32 %v846, 0.4994258
        %v848 = vmul.f32 %v828, %v847
        %v849 = vadd.f32 %v848, 1.0
        %v850 = vrcp.pop %v849
        %v851 = vmul.f32 %v849, %v850
        %v852 = vsub.f32 1.0, %v851
        %v853 = vmul.f32 %v850, %v852
        %v854 = vadd.f32 %v850, %v853
        %vm855 = vweird.f32 %v849
        %vm856 = vweird.f32 %v850
        %vm857 = vmor %vm855, %vm856
        %v858 = vsel %vm857, %v850, %v854
        %v859 = vand.u32 2147483647, %v849
        %vm860 = vcmp.eq.f32.partialorder %v859, 8.507059e+37
        %v861 = vand.u32 %v849, 2147483648
        %v862 = vor.u32 1.1754944e-38, %v861
        %v863 = vsel %vm860, %v862, %v858
        %v864 = vmul.f32 %v839, %v863
        %v865 = vmin.f32 %v864, 1.0
        %v866 = vmax.f32 %v865, -1.0
        %v867 = vmul.f32 %v785, %v785
        %v868 = vmin.f32 16.0, %v867
        %v869 = vmul.f32 %v868, 2.1237322e-06
        %v870 = vadd.f32 %v869, 0.00028619796
        %v871 = vmul.f32 %v868, %v870
        %v872 = vadd.f32 %v871, 0.0036580483
        %v873 = vmul.f32 %v868, %v872
        %v874 = vadd.f32 %v873, 0.05243302
        %v875 = vmul.f32 %v868, %v874
        %v876 = vadd.f32 %v875, 0.18741608
        %v877 = vmul.f32 %v868, %v876
        %v878 = vadd.f32 %v877, 1.1283791
        %v879 = vmul.f32 %v785, %v878
        %v880 = vmul.f32 %v868, 3.8918573e-05
        %v881 = vadd.f32 %v880, 0.001143296
        %v882 = vmul.f32 %v868, %v881
        %v883 = vadd.f32 %v882, 0.014752088
        %v884 = vmul.f32 %v868, %v883
        %v885 = vadd.f32 %v884, 0.112945676
        %v886 = vmul.f32 %v868, %v885
        %v887 = vadd.f32 %v886, 0.4994258
        %v888 = vmul.f32 %v868, %v887
        %v889 = vadd.f32 %v888, 1.0
        %v890 = vrcp.pop %v889
        %v891 = vmul.f32 %v889, %v890
        %v892 = vsub.f32 1.0, %v891
        %v893 = vmul.f32 %v890, %v892
        %v894 = vadd.f32 %v890, %v893
        %vm895 = vweird.f32 %v889
        %vm896 = vweird.f32 %v890
        %vm897 = vmor %vm895, %vm896
        %v898 = vsel %vm897, %v890, %v894
        %v899 = vand.u32 2147483647, %v889
        %vm900 = vcmp.eq.f32.partialorder %v899, 8.507059e+37
        %v901 = vand.u32 %v889, 2147483648
        %v902 = vor.u32 1.1754944e-38, %v901
        %v903 = vsel %vm900, %v902, %v898
        %v904 = vmul.f32 %v879, %v903
        %v905 = vmin.f32 %v904, 1.0
        %v906 = vmax.f32 %v905, -1.0
        %v907 = vmul.f32 %v786, %v786
        %v908 = vmin.f32 16.0, %v907
        %v909 = vmul.f32 %v908, 2.1237322e-06
        %v910 = vadd.f32 %v909, 0.00028619796
        %v911 = vmul.f32 %v908, %v910
        %v912 = vadd.f32 %v911, 0.0036580483
        %v913 = vmul.f32 %v908, %v912
        %v914 = vadd.f32 %v913, 0.05243302
        %v915 = vmul.f32 %v908, %v914
        %v916 = vadd.f32 %v915, 0.18741608
        %v917 = vmul.f32 %v908, %v916
        %v918 = vadd.f32 %v917, 1.1283791
        %v919 = vmul.f32 %v786, %v918
        %v920 = vmul.f32 %v908, 3.8918573e-05
        %v921 = vadd.f32 %v920, 0.001143296
        %v922 = vmul.f32 %v908, %v921
        %v923 = vadd.f32 %v922, 0.014752088
        %v924 = vmul.f32 %v908, %v923
        %v925 = vadd.f32 %v924, 0.112945676
        %v926 = vmul.f32 %v908, %v925
        %v927 = vadd.f32 %v926, 0.4994258
        %v928 = vmul.f32 %v908, %v927
        %v929 = vadd.f32 %v928, 1.0
        %v930 = vrcp.pop %v929
        %v931 = vmul.f32 %v929, %v930
        %v932 = vsub.f32 1.0, %v931
        %v933 = vmul.f32 %v930, %v932
        %v934 = vadd.f32 %v930, %v933
        %vm935 = vweird.f32 %v929
        %vm936 = vweird.f32 %v930
        %vm937 = vmor %vm935, %vm936
        %v938 = vsel %vm937, %v930, %v934
        %v939 = vand.u32 2147483647, %v929
        %vm940 = vcmp.eq.f32.partialorder %v939, 8.507059e+37
        %v941 = vand.u32 %v929, 2147483648
        %v942 = vor.u32 1.1754944e-38, %v941
        %v943 = vsel %vm940, %v942, %v938
        %v944 = vmul.f32 %v919, %v943
        %v945 = vmin.f32 %v944, 1.0
        %v946 = vmax.f32 %v945, -1.0
        %v947 = vadd.f32 %v826, 1.0
        %v948 = vadd.f32 %v866, 1.0
        %v949 = vadd.f32 %v906, 1.0
        %v950 = vadd.f32 %v946, 1.0
        %v951 = vmul.f32 %v779, %v947
        %v952 = vmul.f32 %v780, %v948
        %v953 = vmul.f32 %v781, %v949
        %v954 = vmul.f32 %v782, %v950
        %v955 = vld [vmem:[%s9] sm:$0x1]
        %v957 = vperm.slane %v955, 0
        %v959 = vmul.f32 %v951, %v957
        %v960 = vmul.f32 %v952, %v957
        %v961 = vmul.f32 %v953, %v957
        %v962 = vmul.f32 %v954, %v957
        %963 = vadd.xlane.f32.xlu0 %v959
        %v964 = vpop.xlane.xlu0 %963
        %965 = vadd.xlane.f32.xlu0 %v960
        %v966 = vpop.xlane.xlu0 %965
        %967 = vadd.xlane.f32.xlu0 %v961
        %v968 = vpop.xlane.xlu0 %967
        %969 = vadd.xlane.f32.xlu0 %v962
        %v970 = vpop.xlane.xlu0 %969
        %s971 = sld [smem:[#allocation2]]
        %v972 = vstv %s971
        %v973 = vadd.f32 %v964, %v972
        %v974 = vadd.f32 %v966, %v972
        %v975 = vadd.f32 %v968, %v972
        %v976 = vadd.f32 %v970, %v972
        %v977 = vrot.slane %v973, 4
        %v978 = vmax.f32 %v973, %v977
        %v979 = vrot.slane %v978, 2
        %v980 = vmax.f32 %v978, %v979
        %v981 = vrot.slane %v980, 1
        %v982 = vmax.f32 %v980, %v981
        %v983 = vrot.slane %v974, 4
        %v984 = vmax.f32 %v974, %v983
        %v985 = vrot.slane %v984, 2
        %v986 = vmax.f32 %v984, %v985
        %v987 = vrot.slane %v986, 1
        %v988 = vmax.f32 %v986, %v987
        %v989 = vrot.slane %v975, 4
        %v990 = vmax.f32 %v975, %v989
        %v991 = vrot.slane %v990, 2
        %v992 = vmax.f32 %v990, %v991
        %v993 = vrot.slane %v992, 1
        %v994 = vmax.f32 %v992, %v993
        %v995 = vrot.slane %v976, 4
        %v996 = vmax.f32 %v976, %v995
        %v997 = vrot.slane %v996, 2
        %v998 = vmax.f32 %v996, %v997
        %v999 = vrot.slane %v998, 1
        %v1000 = vmax.f32 %v998, %v999
        %v1001 = vsub.f32 %v973, %v982
        %v1002 = vsub.f32 %v974, %v988
        %v1003 = vsub.f32 %v975, %v994
        %v1004 = vsub.f32 %v976, %v1000
        %v1005 = vmul.f32 %v1001, 1.442695
        %v1006 = vpow.pop %v1005
        %v1007 = vmul.f32 %v1002, 1.442695
        %v1008 = vpow.pop %v1007
        %v1009 = vmul.f32 %v1003, 1.442695
        %v1010 = vpow.pop %v1009
        %v1011 = vmul.f32 %v1004, 1.442695
        %v1012 = vpow.pop %v1011
        %v1013 = vrot.slane %v1006, 4
        %v1014 = vadd.f32 %v1006, %v1013
        %v1015 = vrot.slane %v1014, 2
        %v1016 = vadd.f32 %v1014, %v1015
        %v1017 = vrot.slane %v1016, 1
        %v1018 = vadd.f32 %v1016, %v1017
        %v1019 = vrot.slane %v1008, 4
        %v1020 = vadd.f32 %v1008, %v1019
        %v1021 = vrot.slane %v1020, 2
        %v1022 = vadd.f32 %v1020, %v1021
        %v1023 = vrot.slane %v1022, 1
        %v1024 = vadd.f32 %v1022, %v1023
        %v1025 = vrot.slane %v1010, 4
        %v1026 = vadd.f32 %v1010, %v1025
        %v1027 = vrot.slane %v1026, 2
        %v1028 = vadd.f32 %v1026, %v1027
        %v1029 = vrot.slane %v1028, 1
        %v1030 = vadd.f32 %v1028, %v1029
        %v1031 = vrot.slane %v1012, 4
        %v1032 = vadd.f32 %v1012, %v1031
        %v1033 = vrot.slane %v1032, 2
        %v1034 = vadd.f32 %v1032, %v1033
        %v1035 = vrot.slane %v1034, 1
        %v1036 = vadd.f32 %v1034, %v1035
        %v1037 = vrcp.pop %v1018
        %v1038 = vrcp.pop %v1024
        %v1039 = vrcp.pop %v1030
        %v1040 = vrcp.pop %v1036
        %v1041 = vmul.f32 %v1006, %v1037
        %v1042 = vmul.f32 %v1008, %v1038
        %v1043 = vmul.f32 %v1010, %v1039
        %v1044 = vmul.f32 %v1012, %v1040
        %v1045 = vmul.f32 %v1041, %v415
        %v1046 = vmul.f32 %v1042, %v416
        %v1047 = vmul.f32 %v1043, %v417
        %v1048 = vmul.f32 %v1044, %v418
        %1049 = vst [vmem:[%s397] sm:$0xff] %v1045
        %1050 = vst [vmem:[%s397 + $0x8] sm:$0xff] %v1046
        %1051 = vst [vmem:[%s397 + $0x10] sm:$0xff] %v1047
        %1052 = vst [vmem:[%s397 + $0x18] sm:$0xff] %v1048
        %s1053 = sand.u32 %s275, 1
        %s1054 = scalar_lea.sflag [#allocation4], %s1053
        %s1055 = sand.u32 %s275, 1
        %s1056 = smul.addr %s1055, 32
        %s1057 = scalar_lea.vmem [#allocation3], %s1056
        // Predicated region
        $region65: #{gafn_forward.1} parent=63 // pred_check
          %p1058 = pneg %p285
        $region66: #{gafn_forward.1} parent=63 // pred_check_branch
          %1060 = sbr.rel (%p1058) target = $region68
        $region67: #{gafn_forward.1} parent=63 // pred_region
          %s1061 = smul.u32 4, %s26
          %1063 = vsyncadd %s1054, 0
          %s1064 = smul.addr %s1061, 8
          %s1065 = scalar_lea.hbm %s11, %s1064
          %s1066 = sshll.u32 %s1057, 4
          %s1067 = int_to_ptr.vmem [resolvable:$true] %s1066
          %s1068 = sshll.u32 %s1065, 4
          %s1069 = int_to_ptr.hbm [resolvable:$true] %s1068
          %1074 = dma.vmem_to_hbm [thread:$0]  %s1067, 512, %s1069, %s1054, 128, 128, 8
        $region68: #{gafn_forward.1} parent=63 // pred_fallthru
          _
      $region64: #{gafn_forward.1} parent=5 // pred_fallthru
        _
      %p1075 = scmp.le.s32.totalorder 2, %s21
      // Predicated region
      $region69: #{gafn_forward.1} parent=5 // pred_check
        %p1076 = pneg %p1075
      $region70: #{gafn_forward.1} parent=5 // pred_check_branch
        %1078 = sbr.rel (%p1076) target = $region72
      $region71: #{gafn_forward.1} parent=5 // pred_region
        %s1079 = ssub.s32 %s21, 2
        // Predicated region
        $region73: #{gafn_forward.1} parent=71 // pred_check
          %p1080 = pneg %p291
        $region74: #{gafn_forward.1} parent=71 // pred_check_branch
          %1082 = sbr.rel (%p1080) target = $region76
        $region75: #{gafn_forward.1} parent=71 // pred_region
          %s1083 = sand.u32 %s276, 1
          %s1084 = scalar_lea.sflag [#allocation4], %s1083
          %s1085 = sand.u32 %s276, 1
          %s1086 = smul.addr %s1085, 32
          %s1087 = scalar_lea.vmem [#allocation3], %s1086
          %1089 = dma.done %s1084, 512
        $region76: #{gafn_forward.1} parent=71 // pred_fallthru
          _
      $region72: #{gafn_forward.1} parent=5 // pred_fallthru
        _
    $region6: #{gafn_forward.1} parent=1 // loop_footer
      %s25 = sadd.s32 1, %s21
    $region7: #{gafn_forward.1} parent=1 // loop_footer_branch
      %20 = sbr.rel target = $region3
    $region8: #{gafn_forward.1} parent=1 // loop_exit
      _
    %1090 = vsyncpa [#allocation4], 1
    %s1091 = scalar_lea.sflag [#allocation4], 1
    %1092 = vsyncpa %s1091, 1

</llo_original>
